<compile_context>
chip_gen: v7x
topology: tpu7x:2x2x1
jax: 0.10.0
libtpu: 0.0.40
codegen_flags: <defaults>
</compile_context>

<pallas_src>
import jax
import jax.numpy as jnp
from jax.experimental import pallas as pl
from jax.experimental.pallas import tpu as pltpu


def dga_kernel(key_ref, value_ref, wkv_ref, wa_ref, ctx_ref, attw_ref):
    # key_ref : (TB, K)          value_ref : (TB, N, V)
    # wkv_ref : (K+V, LFP)       wa_ref    : (LFP, 1)
    # ctx_ref : (TB//f, f*V)     attw_ref  : (TB, N, 1)
    tb, n_nbr, v_dim = value_ref.shape
    k_dim = key_ref.shape[-1]

    val3 = value_ref[...]                                    # (TB, N, V)
    val2 = val3.reshape(tb * n_nbr, v_dim)                   # leading-dim collapse

    # Replicate each key row across its N neighbours (row i -> key[i // N]).
    # Replicating the K-wide key is 16x cheaper than replicating the
    # LFP-wide key projection.
    key_rep = jnp.broadcast_to(key_ref[...][:, None, :], (tb, n_nbr, k_dim))
    key_rep = key_rep.reshape(tb * n_nbr, k_dim)             # (TB*N, K)

    # Single fused projection on the MXU: contraction depth K+V, and the
    # key-proj + value-proj add happens inside the matmul.
    lhs = jnp.concatenate([key_rep, val2], axis=-1)          # (TB*N, K+V)
    inter = jnp.tanh(jnp.dot(lhs, wkv_ref[...],
                             preferred_element_type=jnp.float32))  # (TB*N, LFP)

    # Single score matmul, then softmax over the N neighbours in the
    # neighbour-as-sublane column layout (sublane-group reduces).
    scol = jnp.dot(inter, wa_ref[...],
                   preferred_element_type=jnp.float32)       # (TB*N, 1)
    s3 = scol.reshape(tb, n_nbr, 1)                          # (TB, N, 1)
    m = jnp.max(s3, axis=1, keepdims=True)                   # (TB, 1, 1)
    e = jnp.exp(s3 - m)                                      # (TB, N, 1)
    d = jnp.sum(e, axis=1, keepdims=True)                    # (TB, 1, 1)
    w3 = e / d                                               # exact fp32 softmax
    attw_ref[...] = w3.astype(attw_ref.dtype)

    # Weighted sum of values: one lane-broadcast multiply + one sublane reduce.
    ctx = jnp.sum(val3.astype(jnp.float32) * w3, axis=1)     # (TB, V) fp32
    # Lane-fold batch rows into lanes when the output block asks for it
    # (ctx_ref is (TB//f, f*V)); row-major reshape preserves element order.
    ctx_ref[...] = ctx.reshape(ctx_ref.shape).astype(ctx_ref.dtype)


def _pick_batch_tile(B, N, K, V, LFP, itemsize,
                     budget_bytes=32 * 1024 * 1024, cap=1024):
    """Batch rows per grid step, derived from an explicit VMEM budget.

    Block rule: tb % 8 == 0 or tb == B, and tb must divide B.  Prefer at
    least two grid steps so the 'parallel' axis can shard across the two
    v7x TensorCores."""
    def est(tb):
        io = 2 * itemsize * (tb * N * V + tb * K)            # double-buffered inputs
        io += 2 * 4 * (tb * V + tb * N)                      # double-buffered outputs
        w = 2 * itemsize * ((K + V) * LFP) + 2 * 4 * LFP     # resident weights
        inter = 2 * 4 * tb * N * LFP                         # fp32 intermediates
        return io + w + inter

    cands = [tb for tb in range(8, min(B, cap) + 1, 8)
             if B % tb == 0 and est(tb) <= budget_bytes]
    multi = [tb for tb in cands if B // tb >= 2]
    if multi:
        return max(multi)
    if cands:
        return max(cands)
    # TODO(synk): pad B up to a multiple of 8 instead of falling back to one
    # full-B block when a large B has no divisor that is a multiple of 8.
    return B


def _ctx_fold_factor(B, TB, V):
    """Fold f batch rows into lanes so the ctx output block is 128 lanes wide."""
    if V >= 128 or 128 % V != 0:
        return 1
    f = 128 // V
    if TB % f == 0 and ((TB // f) % 8 == 0 or (TB // f) == (B // f)):
        return f
    return 1


def dynamic_graph_attention(key_tensor, value_tensor, wk, wv, wa,
                            compute_dtype=jnp.float32):
    """key_tensor: (B, K), value_tensor: (B, N, V),
       wk: (K, LFP), wv: (V, LFP), wa: (LFP, 1).

       compute_dtype=jnp.bfloat16 halves HBM traffic on the dominant value
       stream and roughly doubles MXU rate on v6e/v7x (relax tolerances if
       used); fp32 accumulation and fp32 softmax/ctx math are kept."""
    B, K = key_tensor.shape
    _, N, V = value_tensor.shape
    LFP = wk.shape[1]
    assert wa.shape == (LFP, 1)

    itemsize = jnp.dtype(compute_dtype).itemsize
    TB = _pick_batch_tile(B, N, K, V, LFP, itemsize)
    fold = _ctx_fold_factor(B, TB, V)
    grid = (B // TB,)

    # Pre-concatenate the key/value projection weights (one-time, tiny) so the
    # kernel runs a single contraction of depth K+V.
    wkv = jnp.concatenate([wk, wv], axis=0).astype(compute_dtype)   # (K+V, LFP)
    key_c = key_tensor.astype(compute_dtype)
    value_c = value_tensor.astype(compute_dtype)
    wa_f32 = wa.astype(jnp.float32)

    ctx_folded, attw_col = pl.pallas_call(
        dga_kernel,
        out_shape=(
            jax.ShapeDtypeStruct((B // fold, fold * V), jnp.float32),  # context
            jax.ShapeDtypeStruct((B, N, 1), jnp.float32),              # weights
        ),
        grid_spec=pltpu.PrefetchScalarGridSpec(
            num_scalar_prefetch=0,
            grid=grid,
            in_specs=[
                pl.BlockSpec((TB, K), lambda b: (b, 0)),          # key
                pl.BlockSpec((TB, N, V), lambda b: (b, 0, 0)),    # value (contiguous)
                pl.BlockSpec((K + V, LFP), lambda b: (0, 0)),     # Wkv (resident)
                pl.BlockSpec((LFP, 1), lambda b: (0, 0)),         # Wa  (resident)
            ],
            out_specs=[
                pl.BlockSpec((TB // fold, fold * V), lambda b: (b, 0)),
                pl.BlockSpec((TB, N, 1), lambda b: (b, 0, 0)),
            ],
        ),
        compiler_params=pltpu.CompilerParams(
            dimension_semantics=("parallel",),
            vmem_limit_bytes=48 * 1024 * 1024,
        ),
    )(key_c, value_c, wkv, wa_f32)

    # Free row-major reshapes back to the module's output shapes.
    return ctx_folded.reshape(B, V), attw_col.reshape(B, N)


def reference(key_tensor, value_tensor, wk, wv, wa):
    kp = key_tensor @ wk                                     # (B, LFP)
    vp = jnp.einsum('bnv,vl->bnl', value_tensor, wv)         # (B, N, LFP)
    inter = jnp.tanh(kp[:, None, :] + vp)                    # (B, N, LFP)
    scores = jnp.einsum('bnl,lo->bno', inter, wa)[..., 0]    # (B, N)
    w = jax.nn.softmax(scores, axis=1)                       # (B, N)
    ctx = jnp.sum(value_tensor * w[..., None], axis=1)       # (B, V)
    return ctx, w


if __name__ == "__main__":
    # Small, deterministic example shapes consistent with the module.
    B, N = 2, 8
    KEY_DIM, VALUE_DIM, LFP = 32, 32, 512

    root = jax.random.PRNGKey(0)
    k_key, k_val, k_wk, k_wv, k_wa = jax.random.split(root, 5)

    key_tensor = jax.random.normal(k_key, (B, KEY_DIM), dtype=jnp.float32)
    value_tensor = jax.random.normal(k_val, (B, N, VALUE_DIM), dtype=jnp.float32)

    # Deterministic parameter init (uniform, PyTorch-Linear-like bounds),
    # stored transposed as [in_dim, out_dim]; wa as a (LFP, 1) column.
    wk = jax.random.uniform(k_wk, (KEY_DIM, LFP), jnp.float32,
                            -1.0 / KEY_DIM ** 0.5, 1.0 / KEY_DIM ** 0.5)
    wv = jax.random.uniform(k_wv, (VALUE_DIM, LFP), jnp.float32,
                            -1.0 / VALUE_DIM ** 0.5, 1.0 / VALUE_DIM ** 0.5)
    wa = jax.random.uniform(k_wa, (LFP, 1), jnp.float32,
                            -1.0 / LFP ** 0.5, 1.0 / LFP ** 0.5)

    ctx, attw = dynamic_graph_attention(key_tensor, value_tensor, wk, wv, wa)
    ctx = jax.block_until_ready(ctx)
    attw = jax.block_until_ready(attw)

    ctx_ref, attw_ref = reference(key_tensor, value_tensor, wk, wv, wa)
    assert ctx.shape == (B, VALUE_DIM) and attw.shape == (B, N)
    # fp32 path; small slack for accumulation-order / transcendental-impl diffs.
    assert jnp.allclose(ctx, ctx_ref, atol=1e-4, rtol=1e-4)
    assert jnp.allclose(attw, attw_ref, atol=1e-4, rtol=1e-4)

    print("KERNEL_OK")
</pallas_src>

<mosaic_0001>
module attributes {stable_mosaic.version = 11 : i64} {
  func.func @dga_kernel(%arg0: i32, %arg1: memref<2x32xf32, #tpu.memory_space<vmem>>, %arg2: memref<2x8x32xf32, #tpu.memory_space<vmem>>, %arg3: memref<64x512xf32, #tpu.memory_space<vmem>>, %arg4: memref<512x1xf32, #tpu.memory_space<vmem>>, %arg5: memref<2x32xf32, #tpu.memory_space<vmem>>, %arg6: memref<2x8x1xf32, #tpu.memory_space<vmem>>) attributes {dimension_semantics = [#tpu.dimension_semantics<parallel>], iteration_bounds = array<i64: 1>, scalar_prefetch = 0 : i64, scratch_operands = 0 : i64, tpu.core_type = #tpu.core_type<tc>, window_params = [{transform_indices = @transform_0, window_bounds = array<i64: 2, 32>}, {transform_indices = @transform_1, window_bounds = array<i64: 2, 8, 32>}, {pipeline_mode = #tpu.pipeline_mode<synchronous>, transform_indices = @transform_2, window_bounds = array<i64: 64, 512>}, {pipeline_mode = #tpu.pipeline_mode<synchronous>, transform_indices = @transform_3, window_bounds = array<i64: 512, 1>}, {transform_indices = @transform_4, window_bounds = array<i64: 2, 32>}, {transform_indices = @transform_5, window_bounds = array<i64: 2, 8, 1>}]} {
    %c0 = arith.constant 0 : index
    %c0_0 = arith.constant 0 : index
    %c0_1 = arith.constant 0 : index
    %0 = vector.load %arg2[%c0, %c0_0, %c0_1] : memref<2x8x32xf32, #tpu.memory_space<vmem>>, vector<2x8x32xf32>
    %1 = vector.shape_cast %0 : vector<2x8x32xf32> to vector<16x32xf32>
    %c0_2 = arith.constant 0 : index
    %c0_3 = arith.constant 0 : index
    %2 = vector.load %arg1[%c0_2, %c0_3] : memref<2x32xf32, #tpu.memory_space<vmem>>, vector<2x32xf32>
    %3 = vector.shape_cast %2 : vector<2x32xf32> to vector<2x1x32xf32>
    %4 = vector.shape_cast %3 : vector<2x1x32xf32> to vector<2x1x32xf32>
    %5 = vector.broadcast %4 : vector<2x1x32xf32> to vector<2x8x32xf32>
    %6 = vector.shape_cast %5 : vector<2x8x32xf32> to vector<16x32xf32>
    %7 = tpu.concatenate %6, %1 in 1 : vector<16x32xf32>, vector<16x32xf32> -> vector<16x64xf32>
    %c0_4 = arith.constant 0 : index
    %c0_5 = arith.constant 0 : index
    %8 = vector.load %arg3[%c0_4, %c0_5] : memref<64x512xf32, #tpu.memory_space<vmem>>, vector<64x512xf32>
    %cst = arith.constant dense<0.000000e+00> : vector<16x512xf32>
    %9 = tpu.matmul %7, %8, %cst {dimension_numbers = #tpu.dot_dimension_numbers<[1], [0], [0], [1], [0, 0, 1, 1], [], []>} : vector<16x64xf32>, vector<64x512xf32>, vector<16x512xf32> -> vector<16x512xf32>
    %10 = math.tanh %9 : vector<16x512xf32>
    %c0_6 = arith.constant 0 : index
    %c0_7 = arith.constant 0 : index
    %11 = vector.load %arg4[%c0_6, %c0_7] : memref<512x1xf32, #tpu.memory_space<vmem>>, vector<512x1xf32>
    %cst_8 = arith.constant dense<0.000000e+00> : vector<16x1xf32>
    %12 = tpu.matmul %10, %11, %cst_8 {dimension_numbers = #tpu.dot_dimension_numbers<[1], [0], [0], [1], [0, 0, 1, 1], [], []>} : vector<16x512xf32>, vector<512x1xf32>, vector<16x1xf32> -> vector<16x1xf32>
    %13 = vector.shape_cast %12 : vector<16x1xf32> to vector<2x8x1xf32>
    %cst_9 = arith.constant dense<0xFF800000> : vector<2x1xf32>
    %14 = vector.multi_reduction <maximumf>, %13, %cst_9 [1] : vector<2x8x1xf32> to vector<2x1xf32>
    %15 = vector.shape_cast %14 : vector<2x1xf32> to vector<2x1x1xf32>
    %16 = vector.broadcast %15 : vector<2x1x1xf32> to vector<2x8x1xf32>
    %17 = arith.subf %13, %16 : vector<2x8x1xf32>
    %18 = math.exp %17 : vector<2x8x1xf32>
    %cst_10 = arith.constant dense<0.000000e+00> : vector<2x1xf32>
    %19 = vector.multi_reduction <add>, %18, %cst_10 [1] : vector<2x8x1xf32> to vector<2x1xf32>
    %20 = vector.shape_cast %19 : vector<2x1xf32> to vector<2x1x1xf32>
    %21 = vector.broadcast %20 : vector<2x1x1xf32> to vector<2x8x1xf32>
    %22 = arith.divf %18, %21 : vector<2x8x1xf32>
    %c0_11 = arith.constant 0 : index
    %c0_12 = arith.constant 0 : index
    %c0_13 = arith.constant 0 : index
    %23 = vector.load %arg6[%c0_11, %c0_12, %c0_13] : memref<2x8x1xf32, #tpu.memory_space<vmem>>, vector<2x8x1xf32>
    tpu.vector_store %arg6[%c0_11, %c0_12, %c0_13], %22 {strides = array<i32>} : memref<2x8x1xf32, #tpu.memory_space<vmem>>, vector<2x8x1xf32>,
    %24 = vector.broadcast %22 : vector<2x8x1xf32> to vector<2x8x32xf32>
    %25 = arith.mulf %0, %24 : vector<2x8x32xf32>
    %cst_14 = arith.constant dense<0.000000e+00> : vector<2x32xf32>
    %26 = vector.multi_reduction <add>, %25, %cst_14 [1] : vector<2x8x32xf32> to vector<2x32xf32>
    %c0_15 = arith.constant 0 : index
    %c0_16 = arith.constant 0 : index
    %27 = vector.load %arg5[%c0_15, %c0_16] : memref<2x32xf32, #tpu.memory_space<vmem>>, vector<2x32xf32>
    tpu.vector_store %arg5[%c0_15, %c0_16], %26 {strides = array<i32>} : memref<2x32xf32, #tpu.memory_space<vmem>>, vector<2x32xf32>,
    return
  }
  func.func @transform_0(%arg0: i32) -> (i32, i32) {
    %c0_i32 = arith.constant 0 : i32
    %c0_i32_0 = arith.constant 0 : i32
    return %arg0, %c0_i32 : i32, i32
  }
  func.func @transform_1(%arg0: i32) -> (i32, i32, i32) {
    %c0_i32 = arith.constant 0 : i32
    %c0_i32_0 = arith.constant 0 : i32
    %c0_i32_1 = arith.constant 0 : i32
    return %arg0, %c0_i32, %c0_i32_0 : i32, i32, i32
  }
  func.func @transform_2(%arg0: i32) -> (i32, i32) {
    %c0_i32 = arith.constant 0 : i32
    %c0_i32_0 = arith.constant 0 : i32
    %c0_i32_1 = arith.constant 0 : i32
    return %c0_i32, %c0_i32_0 : i32, i32
  }
  func.func @transform_3(%arg0: i32) -> (i32, i32) {
    %c0_i32 = arith.constant 0 : i32
    %c0_i32_0 = arith.constant 0 : i32
    %c0_i32_1 = arith.constant 0 : i32
    return %c0_i32, %c0_i32_0 : i32, i32
  }
  func.func @transform_4(%arg0: i32) -> (i32, i32) {
    %c0_i32 = arith.constant 0 : i32
    %c0_i32_0 = arith.constant 0 : i32
    return %arg0, %c0_i32 : i32, i32
  }
  func.func @transform_5(%arg0: i32) -> (i32, i32, i32) {
    %c0_i32 = arith.constant 0 : i32
    %c0_i32_0 = arith.constant 0 : i32
    %c0_i32_1 = arith.constant 0 : i32
    return %arg0, %c0_i32, %c0_i32_0 : i32, i32, i32
  }
}

</mosaic_0001>

<llo_original>
// kernel: tpu_custom_call.1
$region0: #{tpu_custom_call.1}
  #allocation0 [shape = 'u32[]', space=smem, size = 0x4, offset = 0x4, fixed_abs, tag = 'smem constant byte address 0x4 - core index']
  #allocation1 [shape = 'u32[144,128]{1,0:T(1,128)}', space=vmem, size = 0x12000, scoped, tag = 'internal scratch']
  %s0 = inlined_call_operand.vmem [shape: f32[2,32], index: 0, kind: input, shape index: {}]
  %s1 = inlined_call_operand.vmem [shape: f32[2,8,32], index: 1, kind: input, shape index: {}]
  %s2 = inlined_call_operand.vmem [shape: f32[64,512], index: 2, kind: input, shape index: {}]
  %s3 = inlined_call_operand.vmem [shape: f32[512,1], index: 3, kind: input, shape index: {}]
  %s4 = inlined_call_operand.hbm [shape: f32[2,32], index: 4, kind: output, shape index: {0}]
  %s5 = inlined_call_operand.vmem [shape: f32[2,8,1], index: 5, kind: output, shape index: {1}]
  %6 = xla_tuple %s4, %s5
  %s7 = sld [smem:[#allocation0]]
  $region34: #{tpu_custom_call.1} parent=0
    _
  %s9 = ssub.s32 1, %s7
  %s10 = scalar_select 0, %s9, %s7
  $region1: #{tpu_custom_call.1} parent=0
    #allocation2 [shape = 'u8[1024]{0}', space=vmem, size = 0x400, scoped, tag = 'output window, operand 0, single buffered']
    #allocation3 [shape = 's32[1]{0}', space=sflag, size = 0x4, scoped, tag = 'scoped memory for tpu_custom_call.1']
    %11 = vsyncpa [#allocation3], 0
    // Predicated region
    $region2: #{tpu_custom_call.1} parent=1 // pred_check
      _
    $region3: #{tpu_custom_call.1} parent=1 // pred_check_branch
      %13 = sbr.rel (0) target = $region5
    $region4: #{tpu_custom_call.1} parent=1 // pred_region
      _
    $region5: #{tpu_custom_call.1} parent=1 // pred_fallthru
      _
    // Predicated region
    $region6: #{tpu_custom_call.1} parent=1 // pred_check
      _
    $region7: #{tpu_custom_call.1} parent=1 // pred_check_branch
      %15 = sbr.rel (0) target = $region9
    $region8: #{tpu_custom_call.1} parent=1 // pred_region
      _
    $region9: #{tpu_custom_call.1} parent=1 // pred_fallthru
      _
    // Predicated region
    $region10: #{tpu_custom_call.1} parent=1 // pred_check
      _
    $region11: #{tpu_custom_call.1} parent=1 // pred_check_branch
      %17 = sbr.rel (0) target = $region13
    $region12: #{tpu_custom_call.1} parent=1 // pred_region
      _
    $region13: #{tpu_custom_call.1} parent=1 // pred_fallthru
      _
    // Predicated region
    $region14: #{tpu_custom_call.1} parent=1 // pred_check
      _
    $region15: #{tpu_custom_call.1} parent=1 // pred_check_branch
      %19 = sbr.rel (0) target = $region17
    $region16: #{tpu_custom_call.1} parent=1 // pred_region
      _
    $region17: #{tpu_custom_call.1} parent=1 // pred_fallthru
      _
    %v20 = vld [vmem:[%s1] sm:$0xff]
    %v21 = vld [vmem:[%s1 + $0x8] sm:$0xff]
    %v22 = vld [vmem:[%s0] sm:$0x3]
    %v25 = vunpack.c.l.s4 1966171168
    %v26 = vunpack.c.0.s8 %v25
    %v27 = vlaneseq
    %v28 = vshrl.u32 %v27, 7
    %v29 = vsub.s32 %v26, %v28
    %v30 = vrot.slane %v22, %v29
    %v31 = vcombine.high %v30, %v30
    %v33 = vunpack.c.l.s4 1966171168
    %v34 = vunpack.c.0.s8 %v33
    %v35 = vlaneseq
    %v36 = vshrl.u32 %v35, 7
    %v37 = vsub.s32 %v34, %v36
    %v38 = vrot.slane %v30, %v37
    %v40 = vunpack.c.l.s4 1966171168
    %v41 = vunpack.c.0.s8 %v40
    %v42 = vlaneseq
    %v43 = vshrl.u32 %v42, 7
    %v44 = vsub.s32 %v41, %v43
    %v45 = vrot.slane %v31, %v44
    %v46 = vlaneseq
    %v47 = vshrl.u32 %v46, 7
    %v48 = vsub.s32 0, %v47
    %v49 = vrot.slane %v38, %v48
    %v50 = vlaneseq
    %v51 = vshrl.u32 %v50, 7
    %v52 = vsub.s32 0, %v51
    %v53 = vrot.slane %v45, %v52
    %58 = vrot.lane.b32.xlu0 %v20, 32
    %v59 = vpop.permute.xlu0 %58
    %60 = vrot.lane.b32.xlu0 %v21, 32
    %v61 = vpop.permute.xlu0 %60
    %vm64 = vcmask 261120
    %v65 = vsel %vm64, %v49, %v59
    %v66 = vsel %vm64, %v53, %v61
    %v67 = vld [vmem:[%s2] sm:$0xff]
    %v68 = vld [vmem:[%s2 + $0x8] sm:$0xff]
    %v69 = vld [vmem:[%s2 + $0x10] sm:$0xff]
    %v70 = vld [vmem:[%s2 + $0x18] sm:$0xff]
    %v71 = vld [vmem:[%s2 + $0x20] sm:$0xff]
    %v72 = vld [vmem:[%s2 + $0x28] sm:$0xff]
    %v73 = vld [vmem:[%s2 + $0x30] sm:$0xff]
    %v74 = vld [vmem:[%s2 + $0x38] sm:$0xff]
    %v75 = vld [vmem:[%s2 + $0x40] sm:$0xff]
    %v76 = vld [vmem:[%s2 + $0x48] sm:$0xff]
    %v77 = vld [vmem:[%s2 + $0x50] sm:$0xff]
    %v78 = vld [vmem:[%s2 + $0x58] sm:$0xff]
    %v79 = vld [vmem:[%s2 + $0x60] sm:$0xff]
    %v80 = vld [vmem:[%s2 + $0x68] sm:$0xff]
    %v81 = vld [vmem:[%s2 + $0x70] sm:$0xff]
    %v82 = vld [vmem:[%s2 + $0x78] sm:$0xff]
    %v83 = vld [vmem:[%s2 + $0x80] sm:$0xff]
    %v84 = vld [vmem:[%s2 + $0x88] sm:$0xff]
    %v85 = vld [vmem:[%s2 + $0x90] sm:$0xff]
    %v86 = vld [vmem:[%s2 + $0x98] sm:$0xff]
    %v87 = vld [vmem:[%s2 + $0xa0] sm:$0xff]
    %v88 = vld [vmem:[%s2 + $0xa8] sm:$0xff]
    %v89 = vld [vmem:[%s2 + $0xb0] sm:$0xff]
    %v90 = vld [vmem:[%s2 + $0xb8] sm:$0xff]
    %v91 = vld [vmem:[%s2 + $0xc0] sm:$0xff]
    %v92 = vld [vmem:[%s2 + $0xc8] sm:$0xff]
    %v93 = vld [vmem:[%s2 + $0xd0] sm:$0xff]
    %v94 = vld [vmem:[%s2 + $0xd8] sm:$0xff]
    %v95 = vld [vmem:[%s2 + $0xe0] sm:$0xff]
    %v96 = vld [vmem:[%s2 + $0xe8] sm:$0xff]
    %v97 = vld [vmem:[%s2 + $0xf0] sm:$0xff]
    %v98 = vld [vmem:[%s2 + $0xf8] sm:$0xff]
    %vm99 = vcmask 523264
    %v101 = vsel %vm99, %v65, 0
    %v104 = vsel %vm99, %v66, 0
    %106 = vmatprep.subr.mxu0 %v68
    %107 = vmatpush1.msra.mxu0 %v67
    %108 = vmatprep.subr.mxu0 %v72
    %109 = vmatpush1.msra.mxu0 %v71
    %110 = vmatprep.subr.mxu0 %v76
    %111 = vmatpush1.msra.mxu0 %v75
    %112 = vmatprep.subr.mxu0 %v80
    %113 = vmatpush1.msra.mxu0 %v79
    %114 = vmatprep.subr.mxu0 %v84
    %115 = vmatpush1.msra.mxu0 %v83
    %116 = vmatprep.subr.mxu0 %v88
    %117 = vmatpush1.msra.mxu0 %v87
    %118 = vmatprep.subr.mxu0 %v92
    %119 = vmatpush1.msra.mxu0 %v91
    %120 = vmatprep.subr.mxu0 %v96
    %121 = vmatpush1.msra.mxu0 %v95
    %122 = vmatprep.subr.mxu0 0.0
    %123 = vmatpush1.msra.mxu0 0.0
    %124 = vmatprep.subr.mxu0 0.0
    %125 = vmatpush1.msra.mxu0 0.0
    %126 = vmatprep.subr.mxu0 0.0
    %127 = vmatpush1.msra.mxu0 0.0
    %128 = vmatprep.subr.mxu0 0.0
    %129 = vmatpush1.msra.mxu0 0.0
    %130 = vmatprep.subr.mxu0 0.0
    %131 = vmatpush1.msra.mxu0 0.0
    %132 = vmatprep.subr.mxu0 0.0
    %133 = vmatpush1.msra.mxu0 0.0
    %134 = vmatprep.subr.mxu0 0.0
    %135 = vmatpush1.msra.mxu0 0.0
    %136 = vmatprep.subr.mxu0 0.0
    %137 = vmatpush1.msra.mxu0 0.0
    %138 = vmatprep.subr.mxu0 0.0
    %139 = vmatpush1.msra.mxu0 0.0
    %140 = vmatprep.subr.mxu0 0.0
    %141 = vmatpush1.msra.mxu0 0.0
    %142 = vmatprep.subr.mxu0 0.0
    %143 = vmatpush1.msra.mxu0 0.0
    %144 = vmatprep.subr.mxu0 0.0
    %145 = vmatpush1.msra.mxu0 0.0
    %146 = vmatprep.subr.mxu0 0.0
    %147 = vmatpush1.msra.mxu0 0.0
    %148 = vmatprep.subr.mxu0 0.0
    %149 = vmatpush1.msra.mxu0 0.0
    %150 = vmatprep.subr.mxu0 0.0
    %151 = vmatpush1.msra.mxu0 0.0
    %152 = vmatprep.subr.mxu0 0.0
    %153 = vmatpush1.msra.mxu0 0.0
    %154 = vmatprep.subr.mxu0 0.0
    %155 = vmatpush1.msra.mxu0 0.0
    %156 = vmatprep.subr.mxu0 0.0
    %157 = vmatpush1.msra.mxu0 0.0
    %158 = vmatprep.subr.mxu0 0.0
    %159 = vmatpush1.msra.mxu0 0.0
    %160 = vmatprep.subr.mxu0 0.0
    %161 = vmatpush1.msra.mxu0 0.0
    %162 = vmatprep.subr.mxu0 0.0
    %163 = vmatpush1.msra.mxu0 0.0
    %164 = vmatprep.subr.mxu0 0.0
    %165 = vmatpush1.msra.mxu0 0.0
    %166 = vmatprep.subr.mxu0 0.0
    %167 = vmatpush1.msra.mxu0 0.0
    %168 = vmatprep.subr.mxu0 0.0
    %169 = vmatpush1.msra.mxu0 0.0
    %170 = vmatprep.mubr.f32.mxu0 0.0
    %171 = vmatmul.mubr.f32.gmra.mrb[0].mxu0 %v101
    %v172 = vpop.f32.mrb[0].mxu0
    %v173 = vadd.f32 0.0, %v172
    %v174 = vpop.f32.mrb[0].mxu0
    %v175 = vadd.f32 0.0, %v174
    %176 = vmatprep.mubr.f32.mxu0 0.0
    %177 = vmatmul.mubr.f32.gmra.mrb[0].mxu0 %v104
    %v178 = vpop.f32.mrb[0].mxu0
    %v179 = vadd.f32 0.0, %v178
    %v180 = vpop.f32.mrb[0].mxu0
    %v181 = vadd.f32 0.0, %v180
    %182 = vdwg.mxu0
    %183 = vmatprep.subr.mxu0 %v70
    %184 = vmatpush1.msra.mxu0 %v69
    %185 = vmatprep.subr.mxu0 %v74
    %186 = vmatpush1.msra.mxu0 %v73
    %187 = vmatprep.subr.mxu0 %v78
    %188 = vmatpush1.msra.mxu0 %v77
    %189 = vmatprep.subr.mxu0 %v82
    %190 = vmatpush1.msra.mxu0 %v81
    %191 = vmatprep.subr.mxu0 %v86
    %192 = vmatpush1.msra.mxu0 %v85
    %193 = vmatprep.subr.mxu0 %v90
    %194 = vmatpush1.msra.mxu0 %v89
    %195 = vmatprep.subr.mxu0 %v94
    %196 = vmatpush1.msra.mxu0 %v93
    %197 = vmatprep.subr.mxu0 %v98
    %198 = vmatpush1.msra.mxu0 %v97
    %199 = vmatprep.subr.mxu0 0.0
    %200 = vmatpush1.msra.mxu0 0.0
    %201 = vmatprep.subr.mxu0 0.0
    %202 = vmatpush1.msra.mxu0 0.0
    %203 = vmatprep.subr.mxu0 0.0
    %204 = vmatpush1.msra.mxu0 0.0
    %205 = vmatprep.subr.mxu0 0.0
    %206 = vmatpush1.msra.mxu0 0.0
    %207 = vmatprep.subr.mxu0 0.0
    %208 = vmatpush1.msra.mxu0 0.0
    %209 = vmatprep.subr.mxu0 0.0
    %210 = vmatpush1.msra.mxu0 0.0
    %211 = vmatprep.subr.mxu0 0.0
    %212 = vmatpush1.msra.mxu0 0.0
    %213 = vmatprep.subr.mxu0 0.0
    %214 = vmatpush1.msra.mxu0 0.0
    %215 = vmatprep.subr.mxu0 0.0
    %216 = vmatpush1.msra.mxu0 0.0
    %217 = vmatprep.subr.mxu0 0.0
    %218 = vmatpush1.msra.mxu0 0.0
    %219 = vmatprep.subr.mxu0 0.0
    %220 = vmatpush1.msra.mxu0 0.0
    %221 = vmatprep.subr.mxu0 0.0
    %222 = vmatpush1.msra.mxu0 0.0
    %223 = vmatprep.subr.mxu0 0.0
    %224 = vmatpush1.msra.mxu0 0.0
    %225 = vmatprep.subr.mxu0 0.0
    %226 = vmatpush1.msra.mxu0 0.0
    %227 = vmatprep.subr.mxu0 0.0
    %228 = vmatpush1.msra.mxu0 0.0
    %229 = vmatprep.subr.mxu0 0.0
    %230 = vmatpush1.msra.mxu0 0.0
    %231 = vmatprep.subr.mxu0 0.0
    %232 = vmatpush1.msra.mxu0 0.0
    %233 = vmatprep.subr.mxu0 0.0
    %234 = vmatpush1.msra.mxu0 0.0
    %235 = vmatprep.subr.mxu0 0.0
    %236 = vmatpush1.msra.mxu0 0.0
    %237 = vmatprep.subr.mxu0 0.0
    %238 = vmatpush1.msra.mxu0 0.0
    %239 = vmatprep.subr.mxu0 0.0
    %240 = vmatpush1.msra.mxu0 0.0
    %241 = vmatprep.subr.mxu0 0.0
    %242 = vmatpush1.msra.mxu0 0.0
    %243 = vmatprep.subr.mxu0 0.0
    %244 = vmatpush1.msra.mxu0 0.0
    %245 = vmatprep.subr.mxu0 0.0
    %246 = vmatpush1.msra.mxu0 0.0
    %247 = vmatprep.mubr.f32.mxu0 0.0
    %248 = vmatmul.mubr.f32.gmra.mrb[0].mxu0 %v101
    %v249 = vpop.f32.mrb[0].mxu0
    %v250 = vadd.f32 0.0, %v249
    %v251 = vpop.f32.mrb[0].mxu0
    %v252 = vadd.f32 0.0, %v251
    %253 = vmatprep.mubr.f32.mxu0 0.0
    %254 = vmatmul.mubr.f32.gmra.mrb[0].mxu0 %v104
    %v255 = vpop.f32.mrb[0].mxu0
    %v256 = vadd.f32 0.0, %v255
    %v257 = vpop.f32.mrb[0].mxu0
    %v258 = vadd.f32 0.0, %v257
    %259 = vdwg.mxu0
    %v260 = vtanh.pop %v173
    %v261 = vtanh.pop %v175
    %v262 = vtanh.pop %v250
    %v263 = vtanh.pop %v252
    %v264 = vtanh.pop %v179
    %v265 = vtanh.pop %v181
    %v266 = vtanh.pop %v256
    %v267 = vtanh.pop %v258
    %v268 = vld [vmem:[%s3] sm:$0xff]
    %v269 = vld [vmem:[%s3 + $0x8] sm:$0xff]
    %v270 = vld [vmem:[%s3 + $0x10] sm:$0xff]
    %v271 = vld [vmem:[%s3 + $0x18] sm:$0xff]
    %v272 = vld [vmem:[%s3 + $0x20] sm:$0xff]
    %v273 = vld [vmem:[%s3 + $0x28] sm:$0xff]
    %v274 = vld [vmem:[%s3 + $0x30] sm:$0xff]
    %v275 = vld [vmem:[%s3 + $0x38] sm:$0xff]
    %v276 = vld [vmem:[%s3 + $0x40] sm:$0xff]
    %v277 = vld [vmem:[%s3 + $0x48] sm:$0xff]
    %v278 = vld [vmem:[%s3 + $0x50] sm:$0xff]
    %v279 = vld [vmem:[%s3 + $0x58] sm:$0xff]
    %v280 = vld [vmem:[%s3 + $0x60] sm:$0xff]
    %v281 = vld [vmem:[%s3 + $0x68] sm:$0xff]
    %v282 = vld [vmem:[%s3 + $0x70] sm:$0xff]
    %v283 = vld [vmem:[%s3 + $0x78] sm:$0xff]
    %v284 = vld [vmem:[%s3 + $0x80] sm:$0xff]
    %v285 = vld [vmem:[%s3 + $0x88] sm:$0xff]
    %v286 = vld [vmem:[%s3 + $0x90] sm:$0xff]
    %v287 = vld [vmem:[%s3 + $0x98] sm:$0xff]
    %v288 = vld [vmem:[%s3 + $0xa0] sm:$0xff]
    %v289 = vld [vmem:[%s3 + $0xa8] sm:$0xff]
    %v290 = vld [vmem:[%s3 + $0xb0] sm:$0xff]
    %v291 = vld [vmem:[%s3 + $0xb8] sm:$0xff]
    %v292 = vld [vmem:[%s3 + $0xc0] sm:$0xff]
    %v293 = vld [vmem:[%s3 + $0xc8] sm:$0xff]
    %v294 = vld [vmem:[%s3 + $0xd0] sm:$0xff]
    %v295 = vld [vmem:[%s3 + $0xd8] sm:$0xff]
    %v296 = vld [vmem:[%s3 + $0xe0] sm:$0xff]
    %v297 = vld [vmem:[%s3 + $0xe8] sm:$0xff]
    %v298 = vld [vmem:[%s3 + $0xf0] sm:$0xff]
    %v299 = vld [vmem:[%s3 + $0xf8] sm:$0xff]
    %v300 = vld [vmem:[%s3 + $0x100] sm:$0xff]
    %v301 = vld [vmem:[%s3 + $0x108] sm:$0xff]
    %v302 = vld [vmem:[%s3 + $0x110] sm:$0xff]
    %v303 = vld [vmem:[%s3 + $0x118] sm:$0xff]
    %v304 = vld [vmem:[%s3 + $0x120] sm:$0xff]
    %v305 = vld [vmem:[%s3 + $0x128] sm:$0xff]
    %v306 = vld [vmem:[%s3 + $0x130] sm:$0xff]
    %v307 = vld [vmem:[%s3 + $0x138] sm:$0xff]
    %v308 = vld [vmem:[%s3 + $0x140] sm:$0xff]
    %v309 = vld [vmem:[%s3 + $0x148] sm:$0xff]
    %v310 = vld [vmem:[%s3 + $0x150] sm:$0xff]
    %v311 = vld [vmem:[%s3 + $0x158] sm:$0xff]
    %v312 = vld [vmem:[%s3 + $0x160] sm:$0xff]
    %v313 = vld [vmem:[%s3 + $0x168] sm:$0xff]
    %v314 = vld [vmem:[%s3 + $0x170] sm:$0xff]
    %v315 = vld [vmem:[%s3 + $0x178] sm:$0xff]
    %v316 = vld [vmem:[%s3 + $0x180] sm:$0xff]
    %v317 = vld [vmem:[%s3 + $0x188] sm:$0xff]
    %v318 = vld [vmem:[%s3 + $0x190] sm:$0xff]
    %v319 = vld [vmem:[%s3 + $0x198] sm:$0xff]
    %v320 = vld [vmem:[%s3 + $0x1a0] sm:$0xff]
    %v321 = vld [vmem:[%s3 + $0x1a8] sm:$0xff]
    %v322 = vld [vmem:[%s3 + $0x1b0] sm:$0xff]
    %v323 = vld [vmem:[%s3 + $0x1b8] sm:$0xff]
    %v324 = vld [vmem:[%s3 + $0x1c0] sm:$0xff]
    %v325 = vld [vmem:[%s3 + $0x1c8] sm:$0xff]
    %v326 = vld [vmem:[%s3 + $0x1d0] sm:$0xff]
    %v327 = vld [vmem:[%s3 + $0x1d8] sm:$0xff]
    %v328 = vld [vmem:[%s3 + $0x1e0] sm:$0xff]
    %v329 = vld [vmem:[%s3 + $0x1e8] sm:$0xff]
    %v330 = vld [vmem:[%s3 + $0x1f0] sm:$0xff]
    %v331 = vld [vmem:[%s3 + $0x1f8] sm:$0xff]
    %332 = vmatprep.subr.mxu0 0.0
    %333 = vmatpush1.msra.mxu0 %v268
    %334 = vmatprep.subr.mxu0 0.0
    %335 = vmatpush1.msra.mxu0 %v269
    %336 = vmatprep.subr.mxu0 0.0
    %337 = vmatpush1.msra.mxu0 %v270
    %338 = vmatprep.subr.mxu0 0.0
    %339 = vmatpush1.msra.mxu0 %v271
    %340 = vmatprep.subr.mxu0 0.0
    %341 = vmatpush1.msra.mxu0 %v272
    %342 = vmatprep.subr.mxu0 0.0
    %343 = vmatpush1.msra.mxu0 %v273
    %344 = vmatprep.subr.mxu0 0.0
    %345 = vmatpush1.msra.mxu0 %v274
    %346 = vmatprep.subr.mxu0 0.0
    %347 = vmatpush1.msra.mxu0 %v275
    %348 = vmatprep.subr.mxu0 0.0
    %349 = vmatpush1.msra.mxu0 %v276
    %350 = vmatprep.subr.mxu0 0.0
    %351 = vmatpush1.msra.mxu0 %v277
    %352 = vmatprep.subr.mxu0 0.0
    %353 = vmatpush1.msra.mxu0 %v278
    %354 = vmatprep.subr.mxu0 0.0
    %355 = vmatpush1.msra.mxu0 %v279
    %356 = vmatprep.subr.mxu0 0.0
    %357 = vmatpush1.msra.mxu0 %v280
    %358 = vmatprep.subr.mxu0 0.0
    %359 = vmatpush1.msra.mxu0 %v281
    %360 = vmatprep.subr.mxu0 0.0
    %361 = vmatpush1.msra.mxu0 %v282
    %362 = vmatprep.subr.mxu0 0.0
    %363 = vmatpush1.msra.mxu0 %v283
    %364 = vmatprep.subr.mxu0 0.0
    %365 = vmatpush1.msra.mxu0 %v284
    %366 = vmatprep.subr.mxu0 0.0
    %367 = vmatpush1.msra.mxu0 %v285
    %368 = vmatprep.subr.mxu0 0.0
    %369 = vmatpush1.msra.mxu0 %v286
    %370 = vmatprep.subr.mxu0 0.0
    %371 = vmatpush1.msra.mxu0 %v287
    %372 = vmatprep.subr.mxu0 0.0
    %373 = vmatpush1.msra.mxu0 %v288
    %374 = vmatprep.subr.mxu0 0.0
    %375 = vmatpush1.msra.mxu0 %v289
    %376 = vmatprep.subr.mxu0 0.0
    %377 = vmatpush1.msra.mxu0 %v290
    %378 = vmatprep.subr.mxu0 0.0
    %379 = vmatpush1.msra.mxu0 %v291
    %380 = vmatprep.subr.mxu0 0.0
    %381 = vmatpush1.msra.mxu0 %v292
    %382 = vmatprep.subr.mxu0 0.0
    %383 = vmatpush1.msra.mxu0 %v293
    %384 = vmatprep.subr.mxu0 0.0
    %385 = vmatpush1.msra.mxu0 %v294
    %386 = vmatprep.subr.mxu0 0.0
    %387 = vmatpush1.msra.mxu0 %v295
    %388 = vmatprep.subr.mxu0 0.0
    %389 = vmatpush1.msra.mxu0 %v296
    %390 = vmatprep.subr.mxu0 0.0
    %391 = vmatpush1.msra.mxu0 %v297
    %392 = vmatprep.subr.mxu0 0.0
    %393 = vmatpush1.msra.mxu0 %v298
    %394 = vmatprep.subr.mxu0 0.0
    %395 = vmatpush1.msra.mxu0 %v299
    %396 = vmatprep.mubr.f32.mxu0 %v261
    %397 = vmatmul.mubr.f32.gmra.mrb[0].mxu0 %v260
    %v398 = vpop.f32.mrb[0].mxu0
    %v399 = vadd.f32 0.0, %v398
    %v400 = vpop.f32.mrb[0].mxu0
    %401 = vmatprep.mubr.f32.mxu0 %v265
    %402 = vmatmul.mubr.f32.gmra.mrb[0].mxu0 %v264
    %v403 = vpop.f32.mrb[0].mxu0
    %v404 = vadd.f32 0.0, %v403
    %v405 = vpop.f32.mrb[0].mxu0
    %406 = vdwg.mxu0
    %407 = vmatprep.subr.mxu0 0.0
    %408 = vmatpush1.msra.mxu0 %v300
    %409 = vmatprep.subr.mxu0 0.0
    %410 = vmatpush1.msra.mxu0 %v301
    %411 = vmatprep.subr.mxu0 0.0
    %412 = vmatpush1.msra.mxu0 %v302
    %413 = vmatprep.subr.mxu0 0.0
    %414 = vmatpush1.msra.mxu0 %v303
    %415 = vmatprep.subr.mxu0 0.0
    %416 = vmatpush1.msra.mxu0 %v304
    %417 = vmatprep.subr.mxu0 0.0
    %418 = vmatpush1.msra.mxu0 %v305
    %419 = vmatprep.subr.mxu0 0.0
    %420 = vmatpush1.msra.mxu0 %v306
    %421 = vmatprep.subr.mxu0 0.0
    %422 = vmatpush1.msra.mxu0 %v307
    %423 = vmatprep.subr.mxu0 0.0
    %424 = vmatpush1.msra.mxu0 %v308
    %425 = vmatprep.subr.mxu0 0.0
    %426 = vmatpush1.msra.mxu0 %v309
    %427 = vmatprep.subr.mxu0 0.0
    %428 = vmatpush1.msra.mxu0 %v310
    %429 = vmatprep.subr.mxu0 0.0
    %430 = vmatpush1.msra.mxu0 %v311
    %431 = vmatprep.subr.mxu0 0.0
    %432 = vmatpush1.msra.mxu0 %v312
    %433 = vmatprep.subr.mxu0 0.0
    %434 = vmatpush1.msra.mxu0 %v313
    %435 = vmatprep.subr.mxu0 0.0
    %436 = vmatpush1.msra.mxu0 %v314
    %437 = vmatprep.subr.mxu0 0.0
    %438 = vmatpush1.msra.mxu0 %v315
    %439 = vmatprep.subr.mxu0 0.0
    %440 = vmatpush1.msra.mxu0 %v316
    %441 = vmatprep.subr.mxu0 0.0
    %442 = vmatpush1.msra.mxu0 %v317
    %443 = vmatprep.subr.mxu0 0.0
    %444 = vmatpush1.msra.mxu0 %v318
    %445 = vmatprep.subr.mxu0 0.0
    %446 = vmatpush1.msra.mxu0 %v319
    %447 = vmatprep.subr.mxu0 0.0
    %448 = vmatpush1.msra.mxu0 %v320
    %449 = vmatprep.subr.mxu0 0.0
    %450 = vmatpush1.msra.mxu0 %v321
    %451 = vmatprep.subr.mxu0 0.0
    %452 = vmatpush1.msra.mxu0 %v322
    %453 = vmatprep.subr.mxu0 0.0
    %454 = vmatpush1.msra.mxu0 %v323
    %455 = vmatprep.subr.mxu0 0.0
    %456 = vmatpush1.msra.mxu0 %v324
    %457 = vmatprep.subr.mxu0 0.0
    %458 = vmatpush1.msra.mxu0 %v325
    %459 = vmatprep.subr.mxu0 0.0
    %460 = vmatpush1.msra.mxu0 %v326
    %461 = vmatprep.subr.mxu0 0.0
    %462 = vmatpush1.msra.mxu0 %v327
    %463 = vmatprep.subr.mxu0 0.0
    %464 = vmatpush1.msra.mxu0 %v328
    %465 = vmatprep.subr.mxu0 0.0
    %466 = vmatpush1.msra.mxu0 %v329
    %467 = vmatprep.subr.mxu0 0.0
    %468 = vmatpush1.msra.mxu0 %v330
    %469 = vmatprep.subr.mxu0 0.0
    %470 = vmatpush1.msra.mxu0 %v331
    %471 = vmatprep.mubr.f32.mxu0 %v263
    %472 = vmatmul.mubr.f32.gmra.mrb[0].mxu0 %v262
    %v473 = vpop.f32.mrb[0].mxu0
    %v474 = vadd.f32 %v399, %v473
    %v475 = vpop.f32.mrb[0].mxu0
    %476 = vmatprep.mubr.f32.mxu0 %v267
    %477 = vmatmul.mubr.f32.gmra.mrb[0].mxu0 %v266
    %v478 = vpop.f32.mrb[0].mxu0
    %v479 = vadd.f32 %v404, %v478
    %v480 = vpop.f32.mrb[0].mxu0
    %481 = vdwg.mxu0
    %vm482 = vcmask 7168
    %v483 = vsel %vm482, %v474, -inf
    %v484 = vrot.slane %v483, 4
    %v485 = vmax.f32 %v483, %v484
    %v486 = vrot.slane %v485, 2
    %v487 = vmax.f32 %v485, %v486
    %v488 = vrot.slane %v487, 1
    %v489 = vmax.f32 %v487, %v488
    %v490 = vsel %vm482, %v479, -inf
    %v491 = vrot.slane %v490, 4
    %v492 = vmax.f32 %v490, %v491
    %v493 = vrot.slane %v492, 2
    %v494 = vmax.f32 %v492, %v493
    %v495 = vrot.slane %v494, 1
    %v496 = vmax.f32 %v494, %v495
    %v497 = vsub.f32 %v474, %v489
    %v498 = vsub.f32 %v479, %v496
    %v499 = vmul.f32 %v497, 1.442695
    %v500 = vpow.pop %v499
    %v501 = vmul.f32 %v498, 1.442695
    %v502 = vpow.pop %v501
    %v503 = vsel %vm482, %v500, 0.0
    %v504 = vrot.slane %v503, 4
    %v505 = vadd.f32 %v503, %v504
    %v506 = vrot.slane %v505, 2
    %v507 = vadd.f32 %v505, %v506
    %v508 = vrot.slane %v507, 1
    %v509 = vadd.f32 %v507, %v508
    %v510 = vsel %vm482, %v502, 0.0
    %v511 = vrot.slane %v510, 4
    %v512 = vadd.f32 %v510, %v511
    %v513 = vrot.slane %v512, 2
    %v514 = vadd.f32 %v512, %v513
    %v515 = vrot.slane %v514, 1
    %v516 = vadd.f32 %v514, %v515
    %v517 = vrcp.pop %v509
    %v518 = vmul.f32 %v500, %v517
    %v519 = vrcp.pop %v516
    %v520 = vmul.f32 %v502, %v519
    %521 = vst.msk [vmem:[%s5] sm:$0xff] %vm482, %v518
    %522 = vst.msk [vmem:[%s5 + $0x8] sm:$0xff] %vm482, %v520
    %524 = vset.pattern.permute.xlu0 0
    %525 = vperm.xlu0 %524, %v518
    %v526 = vpop.permute.xlu0 %525
    %529 = vset.pattern.permute.xlu0 0
    %530 = vperm.xlu0 %529, %v520
    %v531 = vpop.permute.xlu0 %530
    %v533 = vmul.f32 %v20, %v526
    %v534 = vmul.f32 %v21, %v531
    %v535 = vsel %vm64, %v533, 0.0
    %v536 = vrot.slane %v535, 4
    %v537 = vadd.f32 %v535, %v536
    %v538 = vrot.slane %v537, 2
    %v539 = vadd.f32 %v537, %v538
    %v540 = vrot.slane %v539, 1
    %v541 = vadd.f32 %v539, %v540
    %v542 = vsel %vm64, %v534, 0.0
    %v543 = vrot.slane %v542, 4
    %v544 = vadd.f32 %v542, %v543
    %v545 = vrot.slane %v544, 2
    %v546 = vadd.f32 %v544, %v545
    %v547 = vrot.slane %v546, 1
    %v548 = vadd.f32 %v546, %v547
    %vm551 = vcmask 1041409
    %v552 = vsel %vm551, %v548, %v541
    %vm554 = vcmask 254976
    %555 = vst.msk [vmem:[#allocation2] sm:$0x3] %vm554, %v552
    // Predicated region
    $region18: #{tpu_custom_call.1} parent=1 // pred_check
      _
    $region19: #{tpu_custom_call.1} parent=1 // pred_check_branch
      %557 = sbr.rel (0) target = $region21
    $region20: #{tpu_custom_call.1} parent=1 // pred_region
      %s559 = ssub.s32 32, 32
      %560 = vsyncadd [#allocation3], %s559
      %s562 = sshll.u32 [#allocation2], 4
      %s563 = int_to_ptr.vmem [resolvable:$true] %s562
      %565 = dma.vmem_to_hbm [thread:$0]  %s563, 32, %s4, [#allocation3]
    $region21: #{tpu_custom_call.1} parent=1 // pred_fallthru
      _
    // Predicated region
    $region22: #{tpu_custom_call.1} parent=1 // pred_check
      _
    $region23: #{tpu_custom_call.1} parent=1 // pred_check_branch
      %567 = sbr.rel (0) target = $region25
    $region24: #{tpu_custom_call.1} parent=1 // pred_region
      _
    $region25: #{tpu_custom_call.1} parent=1 // pred_fallthru
      _
    // Predicated region
    $region26: #{tpu_custom_call.1} parent=1 // pred_check
      _
    $region27: #{tpu_custom_call.1} parent=1 // pred_check_branch
      %569 = sbr.rel (0) target = $region29
    $region28: #{tpu_custom_call.1} parent=1 // pred_region
      %570 = dma.done [#allocation3], 32
    $region29: #{tpu_custom_call.1} parent=1 // pred_fallthru
      _
    // Predicated region
    $region30: #{tpu_custom_call.1} parent=1 // pred_check
      _
    $region31: #{tpu_custom_call.1} parent=1 // pred_check_branch
      %572 = sbr.rel (0) target = $region33
    $region32: #{tpu_custom_call.1} parent=1 // pred_region
      _
    $region33: #{tpu_custom_call.1} parent=1 // pred_fallthru
      _
    %573 = vsyncpa [#allocation3], 1

</llo_original>
